<compile_context>
chip_gen: v7x
topology: tpu7x:2x2x1
jax: 0.10.0
libtpu: 0.0.40
codegen_flags: <defaults>
</compile_context>

<pallas_src>
import numpy as np
import jax
import jax.numpy as jnp
from jax.experimental import pallas as pl
from jax.experimental.pallas import tpu as pltpu

# TODO(synk): the Wav2Vec2Model backbone (conv feature extractor + transformer
# encoder) is a large pretrained module with no clean in-script Pallas equivalent;
# the kernel consumes its last-4 hidden states as input instead.


# ---------------------------------------------------------------------------
# Kernel 1: streamed (layer-mean + masked time pooling) as bf16 MXU matvecs
# ---------------------------------------------------------------------------
def _masked_pool_kernel(hs_ref, pw_ref, pooled_ref, acc_ref):
    r = pl.program_id(1)

    @pl.when(r == 0)
    def _init():
        acc_ref[...] = jnp.zeros_like(acc_ref)

    hs = hs_ref[0]      # (tR, H)  bf16, fed straight to the MXU
    w = pw_ref[0]       # (1, tR)  bf16, lane-dense; values are exactly 0 or 0.25

    # Fused 4-layer mean + masked time pooling: acc(1,H) += w @ hs (f32 accumulate).
    acc_ref[...] += jnp.dot(w, hs, preferred_element_type=jnp.float32)

    @pl.when(r == pl.num_programs(1) - 1)
    def _finalize():
        pooled_ref[0] = acc_ref[...]        # un-normalized pooled sum (1/den deferred)


# ---------------------------------------------------------------------------
# Kernel 2: MLP classifier head, run once on the whole (B, H) pooled batch
# ---------------------------------------------------------------------------
def _mlp_head_kernel(pooled_ref, invden_ref,
                     w1_ref, b1_ref, g1_ref, be1_ref,
                     w2_ref, b2_ref, g2_ref, be2_ref,
                     w3_ref, b3_ref, out_ref):
    # Deferred 1/den scaling, applied once in f32.
    x = pooled_ref[...] * invden_ref[...]                     # (B, H)

    def layer_norm(v, gamma, beta):
        mu = jnp.mean(v, axis=-1, keepdims=True)
        var = jnp.mean((v - mu) * (v - mu), axis=-1, keepdims=True)
        return (v - mu) * jax.lax.rsqrt(var + 1e-5) * gamma + beta

    def gelu(v):  # exact (erf-based) GELU, matching nn.GELU() default
        return 0.5 * v * (1.0 + jax.lax.erf(v * jnp.float32(0.7071067811865476)))

    # Linear(H, H) -> LayerNorm -> GELU   (Dropout(0.3) = identity in eval)
    h1 = jnp.dot(x, w1_ref[...], preferred_element_type=jnp.float32) + b1_ref[...]
    h1 = gelu(layer_norm(h1, g1_ref[...], be1_ref[...]))

    # Linear(H, H//2) -> LayerNorm -> GELU (Dropout(0.2) = identity in eval)
    h2 = jnp.dot(h1, w2_ref[...], preferred_element_type=jnp.float32) + b2_ref[...]
    h2 = gelu(layer_norm(h2, g2_ref[...], be2_ref[...]))

    # Linear(H//2, num_labels)
    logits = jnp.dot(h2, w3_ref[...], preferred_element_type=jnp.float32) + b3_ref[...]
    out_ref[...] = logits.astype(out_ref.dtype)


# ---------------------------------------------------------------------------
# Wrapper
# ---------------------------------------------------------------------------
def emotion_classifier_head(hidden_stack, feat_mask, params, *, block_rows=2048):
    """EmotionClassifier pooling + classifier head.

    hidden_stack: (B, 4, T, H)  last-4 wav2vec2 hidden states (bf16 recommended).
    feat_mask:    (B, T)        feature-level attention mask (0/1).
    params:       linear weights stored as (in, out); biases/LN params as (1, dim).
    Returns logits (B, num_labels) float32.
    """
    B, S, T, H = hidden_stack.shape
    assert S == 4
    H2 = params["w2"].shape[1]
    L = params["w3"].shape[1]
    R = S * T

    hs_item = jnp.dtype(hidden_stack.dtype).itemsize

    # ---- row tile: multiple of 128 (lane-dense pw block + clean hs DMA), clamped so
    #      the double-buffered hs tile stays well inside any generation's VMEM.
    max_tr_by_vmem = max(128, (((24 << 20) // (2 * H * hs_item)) // 128) * 128)
    tR = max(128, min(int(block_rows), R, max_tr_by_vmem))
    tR = ((tR + 127) // 128) * 128
    num_tiles = pl.cdiv(R, tR)
    R_pad = num_tiles * tR

    # ---- flatten (layer, time) into one streaming axis; row index = s*T + t
    hs = hidden_stack.reshape(B, R, H)

    m = feat_mask.astype(jnp.float32)                               # (B, T)
    den = jnp.maximum(jnp.sum(m, axis=-1, keepdims=True), 1.0)      # (B, 1), NaN guard
    inv_den = (1.0 / den).astype(jnp.float32)                       # applied in head
    pool_w = 0.25 * jnp.tile(m, (1, S))                             # (B, 4T): 0 or 0.25

    if R_pad != R:                                 # zero-padded rows contribute nothing
        hs = jnp.pad(hs, ((0, 0), (0, R_pad - R), (0, 0)))
        pool_w = jnp.pad(pool_w, ((0, 0), (0, R_pad - R)))
    pool_w = pool_w.reshape(B, 1, R_pad).astype(jnp.bfloat16)       # lane-dense, exact

    # ---- VMEM budget derived from the actual chip (v7x = 64 MiB, v5e/v6e = 128 MiB)
    try:
        vmem_physical = pltpu.get_tpu_info().vmem_capacity_bytes
    except Exception:
        vmem_physical = 64 << 20
    vmem_cap = (52 << 20) if vmem_physical <= (64 << 20) else (100 << 20)
    need = (2 * tR * H * hs_item        # double-buffered hs tiles
            + 2 * tR * 2                # double-buffered pooling-weight tiles (bf16)
            + 2 * H * 4                 # double-buffered pooled output block
            + H * 4                     # f32 accumulator scratch
            + (2 << 20))                # headroom
    vmem_limit = int(min(max(need, 8 << 20), vmem_cap))

    pooled = pl.pallas_call(
        _masked_pool_kernel,
        out_shape=jax.ShapeDtypeStruct((B, 1, H), jnp.float32),
        grid_spec=pltpu.PrefetchScalarGridSpec(
            num_scalar_prefetch=0,
            grid=(B, num_tiles),
            in_specs=[
                pl.BlockSpec((1, tR, H), lambda b, r: (b, r, 0)),   # streamed hs tiles
                pl.BlockSpec((1, 1, tR), lambda b, r: (b, 0, r)),   # lane-dense weights
            ],
            out_specs=pl.BlockSpec((1, 1, H), lambda b, r: (b, 0, 0)),
            scratch_shapes=[pltpu.VMEM((1, H), jnp.float32)]),
        compiler_params=pltpu.CompilerParams(
            dimension_semantics=("parallel", "arbitrary"),
            vmem_limit_bytes=vmem_limit),
    )(hs, pool_w).reshape(B, H)

    # Batched MLP head: one shot over all B rows (M = B on the MXU), everything in VMEM.
    logits = pl.pallas_call(
        _mlp_head_kernel,
        out_shape=jax.ShapeDtypeStruct((B, L), jnp.float32),
    )(pooled, inv_den,
      params["w1"], params["b1"], params["g1"], params["be1"],
      params["w2"], params["b2"], params["g2"], params["be2"],
      params["w3"], params["b3"])
    return logits


# ---------------------------------------------------------------------------
# Glue: feature-extractor output lengths -> feature-level attention mask
# ---------------------------------------------------------------------------
def feat_extract_output_lengths(input_lengths, conv_kernels, conv_strides):
    lengths = input_lengths
    for k, s in zip(conv_kernels, conv_strides):
        lengths = (lengths - k) // s + 1
    return lengths


def feature_vector_attention_mask(feature_vector_length, attention_mask,
                                  conv_kernels, conv_strides):
    out_lens = feat_extract_output_lengths(attention_mask.sum(-1),
                                           conv_kernels, conv_strides)
    frame_idx = jnp.arange(feature_vector_length)[None, :]
    return (frame_idx < out_lens[:, None]).astype(jnp.float32)


# ---------------------------------------------------------------------------
# Pure-JAX reference for verification
# ---------------------------------------------------------------------------
def reference_head(hidden_stack_f32, feat_mask, p):
    h = jnp.mean(hidden_stack_f32, axis=1)
    m = feat_mask[:, :, None]
    pooled = jnp.sum(h * m, axis=1) / jnp.sum(feat_mask, axis=1, keepdims=True)

    def ln(v, g, b):
        mu = jnp.mean(v, -1, keepdims=True)
        var = jnp.mean((v - mu) ** 2, -1, keepdims=True)
        return (v - mu) / jnp.sqrt(var + 1e-5) * g + b

    def gelu(v):
        return 0.5 * v * (1.0 + jax.lax.erf(v / jnp.sqrt(2.0)))

    h1 = gelu(ln(pooled @ p["w1"] + p["b1"], p["g1"], p["be1"]))
    h2 = gelu(ln(h1 @ p["w2"] + p["b2"], p["g2"], p["be2"]))
    return h2 @ p["w3"] + p["b3"]


# ---------------------------------------------------------------------------
if __name__ == "__main__":
    # Small, module-consistent shapes; T chosen so the row grid actually iterates.
    B, T, H, NUM_LABELS = 2, 64, 32, 4           # H = hidden_size, H//2 = 16
    H2 = H // 2
    CONV_KERNELS, CONV_STRIDES = (4, 2), (2, 2)  # toy feature-extractor config
    RAW_LEN = 258                                # full raw row -> 64 feature frames

    key = jax.random.PRNGKey(0)
    ks = jax.random.split(key, 4)

    # Stacked last-4 hidden states from the (not re-implemented) backbone,
    # stored in bf16 for HBM-bandwidth-friendly streaming.
    hidden_f32 = jax.random.normal(ks[0], (B, 4, T, H), dtype=jnp.float32)
    hidden_stack = hidden_f32.astype(jnp.bfloat16)

    # Raw-audio-level attention mask (batch 0: full length, batch 1: shorter).
    raw_mask = np.zeros((B, RAW_LEN), dtype=np.int32)
    raw_mask[0, :258] = 1     # -> 64 feature frames
    raw_mask[1, :200] = 1     # -> 49 feature frames
    raw_mask = jnp.asarray(raw_mask)
    feat_mask = feature_vector_attention_mask(T, raw_mask, CONV_KERNELS, CONV_STRIDES)

    # Deterministic classifier parameters (weights stored as (in, out)).
    params = {
        "w1": jax.random.normal(ks[1], (H, H), dtype=jnp.float32) * 0.05,
        "b1": jnp.zeros((1, H), dtype=jnp.float32),
        "g1": jnp.ones((1, H), dtype=jnp.float32),
        "be1": jnp.zeros((1, H), dtype=jnp.float32),
        "w2": jax.random.normal(ks[2], (H, H2), dtype=jnp.float32) * 0.05,
        "b2": jnp.zeros((1, H2), dtype=jnp.float32),
        "g2": jnp.ones((1, H2), dtype=jnp.float32),
        "be2": jnp.zeros((1, H2), dtype=jnp.float32),
        "w3": jax.random.normal(ks[3], (H2, NUM_LABELS), dtype=jnp.float32) * 0.05,
        "b3": jnp.zeros((1, NUM_LABELS), dtype=jnp.float32),
    }

    # block_rows=128 -> 2 row-tiles per batch row (R = 4*64 = 256): exercises the
    # streamed accumulator. Production default is 2048 (>=4 MiB moved per grid step).
    logits = emotion_classifier_head(hidden_stack, feat_mask, params, block_rows=128)
    logits = jax.block_until_ready(logits)

    # Reference sees the same bf16-rounded hidden states, computed in f32.
    ref = reference_head(hidden_stack.astype(jnp.float32), feat_mask, params)
    assert logits.shape == (B, NUM_LABELS)
    np.testing.assert_allclose(np.asarray(logits), np.asarray(ref),
                               atol=2e-3, rtol=2e-3)

    print("KERNEL_OK")
</pallas_src>

<mosaic_0001>
module attributes {stable_mosaic.version = 11 : i64} {
  func.func @_masked_pool_kernel(%arg0: i32, %arg1: i32, %arg2: memref<1x128x32xbf16, #tpu.memory_space<vmem>>, %arg3: memref<1x1x128xbf16, #tpu.memory_space<vmem>>, %arg4: memref<1x1x32xf32, #tpu.memory_space<vmem>>, %arg5: memref<1x32xf32, #tpu.memory_space<vmem>>) attributes {dimension_semantics = [#tpu.dimension_semantics<parallel>, #tpu.dimension_semantics<arbitrary>], iteration_bounds = array<i64: 2, 2>, scalar_prefetch = 0 : i64, scratch_operands = 1 : i64, tpu.core_type = #tpu.core_type<tc>, window_params = [{transform_indices = @transform_0, window_bounds = array<i64: 1, 128, 32>}, {transform_indices = @transform_1, window_bounds = array<i64: 1, 1, 128>}, {transform_indices = @transform_2, window_bounds = array<i64: 1, 1, 32>}]} {
    %c0_i32 = arith.constant 0 : i32
    %0 = arith.cmpi eq, %arg1, %c0_i32 : i32
    %1 = arith.extui %0 : i1 to i32
    %c0_i32_0 = arith.constant 0 : i32
    %2 = arith.cmpi ne, %1, %c0_i32_0 : i32
    scf.if %2 {
      %cst_11 = arith.constant 0.000000e+00 : f32
      %14 = vector.broadcast %cst_11 : f32 to vector<1x32xf32>
      %c0_12 = arith.constant 0 : index
      %c0_13 = arith.constant 0 : index
      %15 = vector.load %arg5[%c0_12, %c0_13] : memref<1x32xf32, #tpu.memory_space<vmem>>, vector<1x32xf32>
      tpu.vector_store %arg5[%c0_12, %c0_13], %14 {strides = array<i32>} : memref<1x32xf32, #tpu.memory_space<vmem>>, vector<1x32xf32>,
    } else {
    }
    %c0 = arith.constant 0 : index
    %c0_1 = arith.constant 0 : index
    %c0_2 = arith.constant 0 : index
    %3 = vector.load %arg2[%c0, %c0_1, %c0_2] : memref<1x128x32xbf16, #tpu.memory_space<vmem>>, vector<1x128x32xbf16>
    %4 = vector.shape_cast %3 : vector<1x128x32xbf16> to vector<128x32xbf16>
    %c0_3 = arith.constant 0 : index
    %c0_4 = arith.constant 0 : index
    %c0_5 = arith.constant 0 : index
    %5 = vector.load %arg3[%c0_3, %c0_4, %c0_5] : memref<1x1x128xbf16, #tpu.memory_space<vmem>>, vector<1x1x128xbf16>
    %6 = vector.shape_cast %5 : vector<1x1x128xbf16> to vector<1x128xbf16>
    %c0_6 = arith.constant 0 : index
    %c0_7 = arith.constant 0 : index
    %7 = vector.load %arg5[%c0_6, %c0_7] : memref<1x32xf32, #tpu.memory_space<vmem>>, vector<1x32xf32>
    %cst = arith.constant dense<0.000000e+00> : vector<1x32xf32>
    %8 = tpu.matmul %6, %4, %cst {dimension_numbers = #tpu.dot_dimension_numbers<[1], [0], [0], [1], [0, 0, 1, 1], [], []>} : vector<1x128xbf16>, vector<128x32xbf16>, vector<1x32xf32> -> vector<1x32xf32>
    %9 = arith.addf %7, %8 : vector<1x32xf32>
    %c0_8 = arith.constant 0 : index
    %c0_9 = arith.constant 0 : index
    %10 = vector.load %arg5[%c0_8, %c0_9] : memref<1x32xf32, #tpu.memory_space<vmem>>, vector<1x32xf32>
    tpu.vector_store %arg5[%c0_8, %c0_9], %9 {strides = array<i32>} : memref<1x32xf32, #tpu.memory_space<vmem>>, vector<1x32xf32>,
    %c1_i32 = arith.constant 1 : i32
    %11 = arith.cmpi eq, %arg1, %c1_i32 : i32
    %12 = arith.extui %11 : i1 to i32
    %c0_i32_10 = arith.constant 0 : i32
    %13 = arith.cmpi ne, %12, %c0_i32_10 : i32
    scf.if %13 {
      %c0_11 = arith.constant 0 : index
      %c0_12 = arith.constant 0 : index
      %14 = vector.load %arg5[%c0_11, %c0_12] : memref<1x32xf32, #tpu.memory_space<vmem>>, vector<1x32xf32>
      %c0_13 = arith.constant 0 : index
      %c0_14 = arith.constant 0 : index
      %c0_15 = arith.constant 0 : index
      %15 = vector.load %arg4[%c0_13, %c0_14, %c0_15] : memref<1x1x32xf32, #tpu.memory_space<vmem>>, vector<1x1x32xf32>
      %16 = vector.shape_cast %15 : vector<1x1x32xf32> to vector<1x32xf32>
      %17 = vector.shape_cast %14 : vector<1x32xf32> to vector<1x1x32xf32>
      tpu.vector_store %arg4[%c0_13, %c0_14, %c0_15], %17 {strides = array<i32>} : memref<1x1x32xf32, #tpu.memory_space<vmem>>, vector<1x1x32xf32>,
    } else {
    }
    return
  }
  func.func @transform_0(%arg0: i32, %arg1: i32) -> (i32, i32, i32) {
    %c0_i32 = arith.constant 0 : i32
    %c0_i32_0 = arith.constant 0 : i32
    return %arg0, %arg1, %c0_i32 : i32, i32, i32
  }
  func.func @transform_1(%arg0: i32, %arg1: i32) -> (i32, i32, i32) {
    %c0_i32 = arith.constant 0 : i32
    %c0_i32_0 = arith.constant 0 : i32
    return %arg0, %c0_i32, %arg1 : i32, i32, i32
  }
  func.func @transform_2(%arg0: i32, %arg1: i32) -> (i32, i32, i32) {
    %c0_i32 = arith.constant 0 : i32
    %c0_i32_0 = arith.constant 0 : i32
    %c0_i32_1 = arith.constant 0 : i32
    return %arg0, %c0_i32, %c0_i32_0 : i32, i32, i32
  }
}

</mosaic_0001>

<llo_original>
// kernel: tpu_custom_call.1
$region0: #{tpu_custom_call.1}
  #allocation0 [shape = 'u32[]', space=smem, size = 0x4, offset = 0x4, fixed_abs, tag = 'smem constant byte address 0x4 - core index']
  #allocation1 [shape = 'u32[144,128]{1,0:T(1,128)}', space=vmem, size = 0x12000, scoped, tag = 'internal scratch']
  #allocation2 [shape = 'f32[1,32]{1,0:T(1,128)}', space=vmem, size = 0x200, scoped, tag = 'scratch operand']
  %s0 = inlined_call_operand.vmem [shape: bf16[2,256,32], index: 0, kind: input, shape index: {}]
  %s1 = inlined_call_operand.vmem [shape: bf16[2,1,256], index: 1, kind: input, shape index: {}]
  %s2 = inlined_call_operand.hbm [shape: f32[2,1,32], index: 2, kind: output, shape index: {}]
  %s3 = sld [smem:[#allocation0]]
  $region49: #{tpu_custom_call.1} parent=0
    _
  %s5 = ssub.s32 1, %s3
  %s6 = scalar_select 0, %s5, %s3
  $region1: #{tpu_custom_call.1} parent=0
    #allocation3 [shape = 'u8[1024]{0}', space=vmem, size = 0x400, scoped, tag = 'output window, operand 0']
    #allocation4 [shape = 's32[2]{0}', space=sflag, size = 0x8, scoped, tag = 'scoped memory for tpu_custom_call.1']
    %7 = vsyncpa [#allocation4], 0
    %s8 = scalar_lea.sflag [#allocation4], 1
    %9 = vsyncpa %s8, 0
    loop: start=0, step=1, limit=6
    $region2: #{tpu_custom_call.1} parent=1 // loop_pre_header
      _
    $region3: #{tpu_custom_call.1} parent=1 // loop_header
      %s11 = sphi 0, %s15
      %p12 = scmp.ge.s32.totalorder %s11, 6
      %s18 = sphi 0, %s30
      %s19 = sphi 0, %s26
      %s20 = sphi 0, %s18
      %s21 = sphi 0, %s19
      %s22 = sphi 0, %s20
      %s23 = sphi 0, %s21
      %s35 = sphi 0, %s37
      %s38 = sphi 0, %s35
      %s39 = sphi 0, %s38
      %s55 = sphi 0, %s39
      %s63 = sphi 0, %s65
      %s66 = sphi 0, %s63
      %s67 = sphi 0, %s66
      %s83 = sphi 0, %s67
      %s89 = sphi 0, %s91
      %s92 = sphi 0, %s89
      %s93 = sphi 0, %s92
      %s109 = sphi 0, %s93
    $region4: #{tpu_custom_call.1} parent=1 // loop_header_branch
      %14 = sbr.rel (%p12) target = $region8
    $region5: #{tpu_custom_call.1} parent=1 // loop_body
      %s16 = ssub.s32 %s11, 1
      %s17 = ssub.s32 %s11, 2
      %s24 = sadd.s32 1, %s19
      %p25 = scmp.ge.s32.totalorder %s24, 2
      %s26 = scalar_select %p25, 0, %s24
      %s27 = sadd.s32 1, %s18
      %s28 = scalar_select %p25, %s27, %s18
      %p29 = scmp.ge.s32.totalorder %s28, 2
      %s30 = scalar_select %p29, 0, %s28
      %s31 = ssub.s32 %s18, %s30
      %s32 = ssub.s32 %s19, %s26
      %s33 = sor.u32 %s31, %s32
      %p34 = scmp.eq.s32.totalorder %s33, 0
      %s36 = sadd.s32 %s35, 1
      %s37 = scalar_select %p34, %s35, %s36
      %p40 = pneg %p34
      %p41 = scmp.eq.s32.totalorder %s11, 3
      %p42 = por %p40, %p41
      %p43 = scmp.ne.s32.totalorder %s35, %s38
      %p44 = scmp.eq.s32.totalorder %s11, 0
      %p45 = por %p43, %p44
      %p46 = scmp.ne.s32.totalorder %s35, %s38
      %p47 = scmp.eq.s32.totalorder %s16, 3
      %p48 = por %p46, %p47
      %p49 = scmp.ne.s32.totalorder %s38, %s39
      %p50 = scmp.eq.s32.totalorder %s16, 0
      %p51 = por %p49, %p50
      %p52 = scmp.ne.s32.totalorder %s38, %s39
      %p53 = scmp.eq.s32.totalorder %s17, 3
      %p54 = por %p52, %p53
      %p56 = scmp.ne.s32.totalorder %s39, %s55
      %p57 = scmp.eq.s32.totalorder %s17, 0
      %p58 = por %p56, %p57
      %s59 = ssub.s32 %s18, %s30
      %s60 = ssub.s32 %s19, %s26
      %s61 = sor.u32 %s59, %s60
      %p62 = scmp.eq.s32.totalorder %s61, 0
      %s64 = sadd.s32 %s63, 1
      %s65 = scalar_select %p62, %s63, %s64
      %p68 = pneg %p62
      %p69 = scmp.eq.s32.totalorder %s11, 3
      %p70 = por %p68, %p69
      %p71 = scmp.ne.s32.totalorder %s63, %s66
      %p72 = scmp.eq.s32.totalorder %s11, 0
      %p73 = por %p71, %p72
      %p74 = scmp.ne.s32.totalorder %s63, %s66
      %p75 = scmp.eq.s32.totalorder %s16, 3
      %p76 = por %p74, %p75
      %p77 = scmp.ne.s32.totalorder %s66, %s67
      %p78 = scmp.eq.s32.totalorder %s16, 0
      %p79 = por %p77, %p78
      %p80 = scmp.ne.s32.totalorder %s66, %s67
      %p81 = scmp.eq.s32.totalorder %s17, 3
      %p82 = por %p80, %p81
      %p84 = scmp.ne.s32.totalorder %s67, %s83
      %p85 = scmp.eq.s32.totalorder %s17, 0
      %p86 = por %p84, %p85
      %s87 = ssub.s32 %s18, %s30
      %p88 = scmp.eq.s32.totalorder %s87, 0
      %s90 = sadd.s32 %s89, 1
      %s91 = scalar_select %p88, %s89, %s90
      %p94 = pneg %p88
      %p95 = scmp.eq.s32.totalorder %s11, 3
      %p96 = por %p94, %p95
      %p97 = scmp.ne.s32.totalorder %s89, %s92
      %p98 = scmp.eq.s32.totalorder %s11, 0
      %p99 = por %p97, %p98
      %p100 = scmp.ne.s32.totalorder %s89, %s92
      %p101 = scmp.eq.s32.totalorder %s16, 3
      %p102 = por %p100, %p101
      %p103 = scmp.ne.s32.totalorder %s92, %s93
      %p104 = scmp.eq.s32.totalorder %s16, 0
      %p105 = por %p103, %p104
      %p106 = scmp.ne.s32.totalorder %s92, %s93
      %p107 = scmp.eq.s32.totalorder %s17, 3
      %p108 = por %p106, %p107
      %p110 = scmp.ne.s32.totalorder %s93, %s109
      %p111 = scmp.eq.s32.totalorder %s17, 0
      %p112 = por %p110, %p111
      %p113 = scmp.le.s32.totalorder 1, %s11
      %p114 = scmp.lt.s32.totalorder %s11, 5
      %p115 = pnand %p113, %p114
      %p116 = pneg %p115
      // Predicated region
      $region9: #{tpu_custom_call.1} parent=5 // pred_check
        _
      $region10: #{tpu_custom_call.1} parent=5 // pred_check_branch
        %118 = sbr.rel (%p115) target = $region12
      $region11: #{tpu_custom_call.1} parent=5 // pred_region
        %s119 = ssub.s32 %s11, 1
      $region12: #{tpu_custom_call.1} parent=5 // pred_fallthru
        _
      %p120 = scmp.lt.s32.totalorder %s11, 4
      // Predicated region
      $region13: #{tpu_custom_call.1} parent=5 // pred_check
        %p121 = pneg %p120
      $region14: #{tpu_custom_call.1} parent=5 // pred_check_branch
        %123 = sbr.rel (%p121) target = $region16
      $region15: #{tpu_custom_call.1} parent=5 // pred_region
        // Predicated region
        $region17: #{tpu_custom_call.1} parent=15 // pred_check
          %p124 = pneg %p45
        $region18: #{tpu_custom_call.1} parent=15 // pred_check_branch
          %126 = sbr.rel (%p124) target = $region20
        $region19: #{tpu_custom_call.1} parent=15 // pred_region
          %s127 = smul.u32 16, %s19
          %p128 = scmp.lt.s32.totalorder %s18, 1
          %s129 = scalar_select %p128, %s18, 1
          %p130 = scmp.lt.s32.totalorder %s127, 31
          %s131 = scalar_select %p130, %s127, 31
          %s132 = smul.addr %s129, 32
          %s133 = sadd.s32 %s131, %s132
          %s134 = smul.addr %s133, 4
          %s135 = scalar_lea.vmem %s0, %s134
          %s136 = smul.u32 16, %s19
        $region20: #{tpu_custom_call.1} parent=15 // pred_fallthru
          _
        // Predicated region
        $region21: #{tpu_custom_call.1} parent=15 // pred_check
          %p137 = pneg %p73
        $region22: #{tpu_custom_call.1} parent=15 // pred_check_branch
          %139 = sbr.rel (%p137) target = $region24
        $region23: #{tpu_custom_call.1} parent=15 // pred_region
          %p140 = scmp.lt.s32.totalorder %s18, 1
          %s141 = scalar_select %p140, %s18, 1
          %p142 = scmp.lt.s32.totalorder %s19, 1
          %s143 = scalar_select %p142, %s19, 1
          %s144 = smul.addr %s141, 2
          %s145 = sadd.s32 %s143, %s144
          %s146 = scalar_lea.vmem %s1, %s145
        $region24: #{tpu_custom_call.1} parent=15 // pred_fallthru
          _
      $region16: #{tpu_custom_call.1} parent=5 // pred_fallthru
        _
      %p147 = scmp.le.s32.totalorder 1, %s11
      %p148 = scmp.lt.s32.totalorder %s11, 5
      %p149 = pnand %p147, %p148
      %p150 = pneg %p149
      // Predicated region
      $region25: #{tpu_custom_call.1} parent=5 // pred_check
        _
      $region26: #{tpu_custom_call.1} parent=5 // pred_check_branch
        %152 = sbr.rel (%p149) target = $region28
      $region27: #{tpu_custom_call.1} parent=5 // pred_region
        %s153 = ssub.s32 %s11, 1
        %s154 = smul.u32 16, %s21
        %p155 = scmp.lt.s32.totalorder %s20, 1
        %s156 = scalar_select %p155, %s20, 1
        %p157 = scmp.lt.s32.totalorder %s154, 31
        %s158 = scalar_select %p157, %s154, 31
        %s159 = smul.addr %s156, 32
        %s160 = sadd.s32 %s158, %s159
        %s161 = smul.addr %s160, 4
        %s162 = scalar_lea.vmem %s0, %s161
        %p163 = pneg %p51
        %p164 = pneg %p48
        %p165 = scmp.lt.s32.totalorder %s20, 1
        %s166 = scalar_select %p165, %s20, 1
        %p167 = scmp.lt.s32.totalorder %s21, 1
        %s168 = scalar_select %p167, %s21, 1
        %s169 = smul.addr %s166, 2
        %s170 = sadd.s32 %s168, %s169
        %s171 = scalar_lea.vmem %s1, %s170
        %p172 = pneg %p79
        %p173 = pneg %p76
        %p174 = pneg %p105
        %p175 = pneg %p102
        %s176 = sand.u32 %s92, 1
        %s177 = scalar_lea.sflag [#allocation4], %s176
        %s178 = sand.u32 %s92, 1
        %s179 = scalar_lea.vmem [#allocation3], %s178
        %s180 = smul.u32 16, %s21
        %p181 = scmp.lt.s32.totalorder %s20, 1
        %s182 = scalar_select %p181, %s20, 1
        %p183 = scmp.lt.s32.totalorder %s180, 31
        %s184 = scalar_select %p183, %s180, 31
        %s185 = smul.addr %s182, 32
        %s186 = sadd.s32 %s184, %s185
        %s187 = smul.addr %s186, 4
        %s188 = scalar_lea.vmem %s0, %s187
        %s189 = smul.u32 16, %s21
        %p190 = scmp.lt.s32.totalorder %s20, 1
        %s191 = scalar_select %p190, %s20, 1
        %p192 = scmp.lt.s32.totalorder %s21, 1
        %s193 = scalar_select %p192, %s21, 1
        %s194 = smul.addr %s191, 2
        %s195 = sadd.s32 %s193, %s194
        %s196 = scalar_lea.vmem %s1, %s195
        %p198 = scmp.eq.s32.totalorder %s21, 0
        // Predicated region
        $region29: #{tpu_custom_call.1} parent=27 // pred_check
          %p199 = pneg %p198
        $region30: #{tpu_custom_call.1} parent=27 // pred_check_branch
          %201 = sbr.rel (%p199) target = $region32
        $region31: #{tpu_custom_call.1} parent=27 // pred_region
          %vm202 = vcmask 253952
          %203 = vst.msk [vmem:[#allocation2] sm:$0x1] %vm202, 0.0
        $region32: #{tpu_custom_call.1} parent=27 // pred_fallthru
          _
        %v204 = vld [vmem:[%s188] sm:$0xf]
        %v205 = vld [vmem:[%s188 + $0x4] sm:$0xf]
        %v206 = vld [vmem:[%s188 + $0x8] sm:$0xf]
        %v207 = vld [vmem:[%s188 + $0xc] sm:$0xf]
        %v208 = vld [vmem:[%s188 + $0x10] sm:$0xf]
        %v209 = vld [vmem:[%s188 + $0x14] sm:$0xf]
        %v210 = vld [vmem:[%s188 + $0x18] sm:$0xf]
        %v211 = vld [vmem:[%s188 + $0x1c] sm:$0xf]
        %v212 = vld [vmem:[%s188 + $0x20] sm:$0xf]
        %v213 = vld [vmem:[%s188 + $0x24] sm:$0xf]
        %v214 = vld [vmem:[%s188 + $0x28] sm:$0xf]
        %v215 = vld [vmem:[%s188 + $0x2c] sm:$0xf]
        %v216 = vld [vmem:[%s188 + $0x30] sm:$0xf]
        %v217 = vld [vmem:[%s188 + $0x34] sm:$0xf]
        %v218 = vld [vmem:[%s188 + $0x38] sm:$0xf]
        %v219 = vld [vmem:[%s188 + $0x3c] sm:$0xf]
        %v220 = vld [vmem:[%s196] sm:$0x1]
        %v221 = vld [vmem:[#allocation2] sm:$0x1]
        %v238 = vunpack.c.l.b16 %v204
        %v239 = vunpack.c.l.b16 %v205
        %v240 = vunpack.c.l.b16 %v206
        %v241 = vunpack.c.l.b16 %v207
        %v242 = vunpack.c.l.b16 %v208
        %v243 = vunpack.c.l.b16 %v209
        %v244 = vunpack.c.l.b16 %v210
        %v245 = vunpack.c.l.b16 %v211
        %v246 = vunpack.c.l.b16 %v212
        %v247 = vunpack.c.l.b16 %v213
        %v248 = vunpack.c.l.b16 %v214
        %v249 = vunpack.c.l.b16 %v215
        %v250 = vunpack.c.l.b16 %v216
        %v251 = vunpack.c.l.b16 %v217
        %v252 = vunpack.c.l.b16 %v218
        %v253 = vunpack.c.l.b16 %v219
        %v254 = vpack.c.b16 %v239, %v238
        %v255 = vpack.c.b16 %v241, %v240
        %v256 = vpack.c.b16 %v243, %v242
        %v257 = vpack.c.b16 %v245, %v244
        %v258 = vpack.c.b16 %v247, %v246
        %v259 = vpack.c.b16 %v249, %v248
        %v260 = vpack.c.b16 %v251, %v250
        %v261 = vpack.c.b16 %v253, %v252
        %270 = vmatprep.subr.bf16.mxu0 0
        %271 = vmatpush1.bf16.msra.mxu0 %v254
        %272 = vmatprep.subr.bf16.mxu0 0
        %273 = vmatpush1.bf16.msra.mxu0 %v255
        %274 = vmatprep.subr.bf16.mxu0 0
        %275 = vmatpush1.bf16.msra.mxu0 %v256
        %276 = vmatprep.subr.bf16.mxu0 0
        %277 = vmatpush1.bf16.msra.mxu0 %v257
        %278 = vmatprep.subr.bf16.mxu0 0
        %279 = vmatpush1.bf16.msra.mxu0 %v258
        %280 = vmatprep.subr.bf16.mxu0 0
        %281 = vmatpush1.bf16.msra.mxu0 %v259
        %282 = vmatprep.subr.bf16.mxu0 0
        %283 = vmatpush1.bf16.msra.mxu0 %v260
        %284 = vmatprep.subr.bf16.mxu0 0
        %285 = vmatpush1.bf16.msra.mxu0 %v261
        %286 = vmatprep.subr.bf16.mxu0 0
        %287 = vmatpush1.bf16.msra.mxu0 0
        %288 = vmatprep.subr.bf16.mxu0 0
        %289 = vmatpush1.bf16.msra.mxu0 0
        %290 = vmatprep.subr.bf16.mxu0 0
        %291 = vmatpush1.bf16.msra.mxu0 0
        %292 = vmatprep.subr.bf16.mxu0 0
        %293 = vmatpush1.bf16.msra.mxu0 0
        %294 = vmatprep.subr.bf16.mxu0 0
        %295 = vmatpush1.bf16.msra.mxu0 0
        %296 = vmatprep.subr.bf16.mxu0 0
        %297 = vmatpush1.bf16.msra.mxu0 0
        %298 = vmatprep.subr.bf16.mxu0 0
        %299 = vmatpush1.bf16.msra.mxu0 0
        %300 = vmatprep.subr.bf16.mxu0 0
        %301 = vmatpush1.bf16.msra.mxu0 0
        %302 = vmatprep.mubr.bf16.mxu0 0
        %303 = vmatmul.mubr.bf16.gmra.mrb[0].mxu0 %v220
        %v304 = vpop.f32.mrb[0].mxu0
        %v305 = vadd.f32 0.0, %v304
        %v306 = vpop.f32.mrb[0].mxu0
        %v307 = vpop.f32.mrb[0].mxu0
        %v308 = vpop.f32.mrb[0].mxu0
        %309 = vdwg.mxu0
        %v310 = vadd.f32 %v221, %v305
        %vm311 = vcmask 253952
        %312 = vst.msk [vmem:[#allocation2] sm:$0x1] %vm311, %v310
        %p313 = scmp.eq.s32.totalorder %s21, 1
        // Predicated region
        $region33: #{tpu_custom_call.1} parent=27 // pred_check
          %p314 = pneg %p313
        $region34: #{tpu_custom_call.1} parent=27 // pred_check_branch
          %316 = sbr.rel (%p314) target = $region36
        $region35: #{tpu_custom_call.1} parent=27 // pred_region
          %v317 = vld [vmem:[#allocation2] sm:$0x1]
          %318 = vst.msk [vmem:[%s179] sm:$0x1] %vm311, %v317
        $region36: #{tpu_custom_call.1} parent=27 // pred_fallthru
          _
        %s319 = sand.u32 %s92, 1
        %s320 = scalar_lea.sflag [#allocation4], %s319
        %s321 = sand.u32 %s92, 1
        %s322 = scalar_lea.vmem [#allocation3], %s321
        // Predicated region
        $region37: #{tpu_custom_call.1} parent=27 // pred_check
          %p323 = pneg %p102
        $region38: #{tpu_custom_call.1} parent=27 // pred_check_branch
          %325 = sbr.rel (%p323) target = $region40
        $region39: #{tpu_custom_call.1} parent=27 // pred_region
          %s327 = ssub.s32 16, 16
          %328 = vsyncadd %s320, %s327
          %s329 = smul.addr %s20, 16
          %s330 = scalar_lea.hbm %s2, %s329
          %s332 = sshll.u32 %s322, 4
          %s333 = int_to_ptr.vmem [resolvable:$true] %s332
          %335 = dma.vmem_to_hbm [thread:$0]  %s333, 16, %s330, %s320
        $region40: #{tpu_custom_call.1} parent=27 // pred_fallthru
          _
      $region28: #{tpu_custom_call.1} parent=5 // pred_fallthru
        _
      %p336 = scmp.le.s32.totalorder 2, %s11
      // Predicated region
      $region41: #{tpu_custom_call.1} parent=5 // pred_check
        %p337 = pneg %p336
      $region42: #{tpu_custom_call.1} parent=5 // pred_check_branch
        %339 = sbr.rel (%p337) target = $region44
      $region43: #{tpu_custom_call.1} parent=5 // pred_region
        %s340 = ssub.s32 %s11, 2
        // Predicated region
        $region45: #{tpu_custom_call.1} parent=43 // pred_check
          %p341 = pneg %p108
        $region46: #{tpu_custom_call.1} parent=43 // pred_check_branch
          %343 = sbr.rel (%p341) target = $region48
        $region47: #{tpu_custom_call.1} parent=43 // pred_region
          %s344 = sand.u32 %s93, 1
          %s345 = scalar_lea.sflag [#allocation4], %s344
          %s346 = sand.u32 %s93, 1
          %s347 = scalar_lea.vmem [#allocation3], %s346
          %348 = dma.done %s345, 16
        $region48: #{tpu_custom_call.1} parent=43 // pred_fallthru
          _
      $region44: #{tpu_custom_call.1} parent=5 // pred_fallthru
        _
    $region6: #{tpu_custom_call.1} parent=1 // loop_footer
      %s15 = sadd.s32 1, %s11
    $region7: #{tpu_custom_call.1} parent=1 // loop_footer_branch
      %10 = sbr.rel target = $region3
    $region8: #{tpu_custom_call.1} parent=1 // loop_exit
      _
    %349 = vsyncpa [#allocation4], 1
    %s350 = scalar_lea.sflag [#allocation4], 1
    %351 = vsyncpa %s350, 1

</llo_original>
